<compile_context>
chip_gen: v7x
topology: tpu7x:2x2x1
jax: 0.10.0
libtpu: 0.0.40
codegen_flags: <defaults>
</compile_context>

<pallas_src>
import functools
from typing import NamedTuple

import jax
import jax.numpy as jnp
from jax.experimental import pallas as pl
from jax.experimental.pallas import tpu as pltpu

THRESH = 0.3
DECAY = 0.2


# ---------------------------------------------------------------------------
# Kernel
# ---------------------------------------------------------------------------
def lif_hh_kernel(patches_ref, w_ref, mem_ref, spike_ref, mem1_ref, spike1_ref, *, C):
    # Fused conv1/conv2/conv3 (+bias via the ones row of patches) as one MXU matmul:
    # (3C, Kp) @ (Kp, TILE) -> (3C, TILE), bf16 inputs, f32 accumulation.
    conv = jnp.dot(w_ref[...], patches_ref[...], preferred_element_type=jnp.float32)

    mem = mem_ref[...]                            # (4C, TILE) f32
    spk = spike_ref[...].astype(jnp.float32)      # (4C, TILE) bf16 -> f32 (exact 0/1)

    # TODO(synk): `ops` is a caller-supplied callable in the PyTorch module; here it
    # is fixed deterministically to a sum over membrane slots 0..2.
    inner = mem[0:C] + mem[C:2 * C] + mem[2 * C:3 * C]          # (C, TILE)

    # Rows of the drive: slots 0..2 = conv branches, slot 3 = inner input.
    # C % 8 == 0 so the concat boundary is sublane-aligned (no masked handling).
    drive = jnp.concatenate([conv, inner], axis=0)              # (4C, TILE) f32

    m1 = mem * DECAY * (1.0 - spk) + drive                      # mem_update (f32)
    mem1_ref[...] = m1                                          # full unmasked store
    spike1_ref[...] = jnp.where(m1 > THRESH, 1.0, 0.0).astype(jnp.bfloat16)


# ---------------------------------------------------------------------------
# Static planning (geometry, padding, tiling)
# ---------------------------------------------------------------------------
class Plan(NamedTuple):
    N: int
    Cin: int
    H: int
    W: int
    Cout: int
    KH: int
    KW: int
    stride: int
    padding: int
    Ho: int
    Wo: int
    P: int
    Cp: int       # Cout padded to a multiple of 8 (aligned sublane slices/stores)
    Kp: int       # (K + 1 bias row) padded to a multiple of 16 (bf16 sublane packing)
    tile_p: int
    P_pad: int


def _round_up(x, m):
    return ((x + m - 1) // m) * m


def make_plan(x_shape, w_shape, stride, padding):
    N, Cin, H, W, T = x_shape
    assert T == 4
    Cout, Cin_w, KH, KW = w_shape
    assert Cin_w == Cin
    Ho = (H + 2 * padding - KH) // stride + 1
    Wo = (W + 2 * padding - KW) // stride + 1
    P = N * Ho * Wo
    Cp = _round_up(Cout, 8)
    Kp = _round_up(KH * KW * Cin + 1, 16)

    # Bytes moved per output column per grid step (patches bf16, mem f32 in/out,
    # spike bf16 in/out); x2 for the double-buffered pipeline.
    bytes_per_col = Kp * 2 + 4 * Cp * (4 + 4) + 4 * Cp * (2 + 2)
    tile_p = 8192
    vmem_budget = 24 * 1024 * 1024
    while tile_p > 128 and 2 * tile_p * bytes_per_col > vmem_budget:
        tile_p //= 2
    # Guarantee >= 4 grid steps (>= 2 per TensorCore on a dual-TC megacore) when P allows.
    while tile_p > 128 and (-(-P // tile_p)) < 4:
        tile_p //= 2
    P_pad = _round_up(P, tile_p)
    return Plan(N, Cin, H, W, Cout, KH, KW, stride, padding, Ho, Wo, P, Cp, Kp,
                tile_p, P_pad)


# ---------------------------------------------------------------------------
# Boundary / packing helpers (run once per layer or at the network boundary)
# ---------------------------------------------------------------------------
def pack_weights(w1, b1, w2, b2, w3, b3, plan):
    """(Cout,Cin,KH,KW)x3 + biases -> fused (3*Cp, Kp) bf16 matrix, bias folded."""
    K = plan.KH * plan.KW * plan.Cin

    def one(w, b):
        wm = jnp.transpose(w, (0, 2, 3, 1)).reshape(plan.Cout, K)   # cols = (kh,kw,cin)
        wm = jnp.concatenate([wm, b.reshape(plan.Cout, 1).astype(wm.dtype)], axis=1)
        return jnp.pad(wm, ((0, plan.Cp - plan.Cout), (0, plan.Kp - (K + 1))))

    return jnp.concatenate([one(w1, b1), one(w2, b2), one(w3, b3)],
                           axis=0).astype(jnp.bfloat16)


def pack_state(mem, spike, plan):
    """NCHW[...,4] state -> persistent lane-dense (4*Cp, P_pad); mem f32, spike bf16."""
    def flat(a):
        a = jnp.transpose(a, (4, 1, 0, 2, 3)).reshape(4, plan.Cout, plan.P)
        a = jnp.pad(a, ((0, 0), (0, plan.Cp - plan.Cout), (0, plan.P_pad - plan.P)))
        return a.reshape(4 * plan.Cp, plan.P_pad)

    return flat(mem).astype(jnp.float32), flat(spike).astype(jnp.bfloat16)


def unpack_state(mem_t, spike_t, plan):
    """Packed (4*Cp, P_pad) state -> NCHW[...,4] f32 (boundary only)."""
    def unflat(a):
        a = a.reshape(4, plan.Cp, plan.P_pad)[:, :plan.Cout, :plan.P]
        a = a.reshape(4, plan.Cout, plan.N, plan.Ho, plan.Wo)
        return jnp.transpose(a, (2, 1, 3, 4, 0))

    return unflat(mem_t), unflat(spike_t.astype(jnp.float32))


def _build_patches(x, plan):
    """is_spike_input=True path: sum the 4 input slots, im2col lane-dense (Kp, P_pad)."""
    x_sum = x[..., 0] + x[..., 1] + x[..., 2] + x[..., 3]          # (N, Cin, H, W)
    x_nhwc = jnp.transpose(x_sum, (0, 2, 3, 1))
    pad = plan.padding
    xp = jnp.pad(x_nhwc, ((0, 0), (pad, pad), (pad, pad), (0, 0)))

    taps = []
    for kh in range(plan.KH):
        for kw in range(plan.KW):
            taps.append(xp[:, kh:kh + plan.Ho * plan.stride:plan.stride,
                              kw:kw + plan.Wo * plan.stride:plan.stride, :])
    K = plan.KH * plan.KW * plan.Cin
    pat = jnp.transpose(jnp.stack(taps, axis=0), (0, 4, 1, 2, 3)).reshape(K, plan.P)
    pat = jnp.concatenate([pat, jnp.ones((1, plan.P), pat.dtype)], axis=0)  # bias row
    pat = jnp.pad(pat, ((0, plan.Kp - (K + 1)), (0, plan.P_pad - plan.P)))
    # TODO(synk): patches still carry the KH*KW im2col blow-up in HBM; building the
    # taps in-kernel from an overlapped NHWC row-band tile would cut that stream ~9x.
    return pat.astype(jnp.bfloat16)


# ---------------------------------------------------------------------------
# One recurrent step on the packed state (the hot path)
# ---------------------------------------------------------------------------
def _step_packed(x, mem_t, spike_t, w3a, *, plan):
    patches = _build_patches(x, plan)
    grid = (plan.P_pad // plan.tile_p,)
    kernel = functools.partial(lif_hh_kernel, C=plan.Cp)

    return pl.pallas_call(
        kernel,
        out_shape=(jax.ShapeDtypeStruct((4 * plan.Cp, plan.P_pad), jnp.float32),
                   jax.ShapeDtypeStruct((4 * plan.Cp, plan.P_pad), jnp.bfloat16)),
        grid_spec=pltpu.PrefetchScalarGridSpec(
            num_scalar_prefetch=0,
            grid=grid,
            in_specs=[
                pl.BlockSpec((plan.Kp, plan.tile_p), lambda i: (0, i)),       # patches
                pl.BlockSpec((3 * plan.Cp, plan.Kp), lambda i: (0, 0)),       # fused W+bias (resident)
                pl.BlockSpec((4 * plan.Cp, plan.tile_p), lambda i: (0, i)),   # mem tile (f32)
                pl.BlockSpec((4 * plan.Cp, plan.tile_p), lambda i: (0, i)),   # spike tile (bf16)
            ],
            out_specs=(
                pl.BlockSpec((4 * plan.Cp, plan.tile_p), lambda i: (0, i)),
                pl.BlockSpec((4 * plan.Cp, plan.tile_p), lambda i: (0, i)),
            ),
        ),
        compiler_params=pltpu.CompilerParams(
            dimension_semantics=("parallel",),
            vmem_limit_bytes=32 * 1024 * 1024),
        input_output_aliases={2: 0, 3: 1},   # donate mem -> mem1, spike -> spike1
    )(patches, w3a, mem_t, spike_t)


lif_hh_step_packed = jax.jit(_step_packed, static_argnames=("plan",),
                             donate_argnums=(1, 2))


# ---------------------------------------------------------------------------
# Boundary API matching the PyTorch module's forward (single step, NCHW[...,4] io)
# ---------------------------------------------------------------------------
@functools.partial(jax.jit, static_argnames=("stride", "padding"))
def lif_hh_forward(x, mem, spike, w1, b1, w2, b2, w3, b3, *, stride, padding):
    plan = make_plan(x.shape, w1.shape, stride, padding)
    w3a = pack_weights(w1, b1, w2, b2, w3, b3, plan)
    mem_t, spike_t = pack_state(mem, spike, plan)
    mem1_t, spike1_t = _step_packed(x, mem_t, spike_t, w3a, plan=plan)
    return unpack_state(mem1_t, spike1_t, plan)


# ---------------------------------------------------------------------------
# Pure-JAX f32 reference
# ---------------------------------------------------------------------------
def _reference_mem1(x, mem, spike, w1, b1, w2, b2, w3, b3, *, stride, padding):
    x_sum = x[..., 0] + x[..., 1] + x[..., 2] + x[..., 3]
    dn = jax.lax.conv_dimension_numbers(x_sum.shape, w1.shape,
                                        ("NCHW", "OIHW", "NCHW"))

    def conv(w, b):
        y = jax.lax.conv_general_dilated(
            x_sum, w, window_strides=(stride, stride),
            padding=[(padding, padding), (padding, padding)],
            dimension_numbers=dn)
        return y + b[None, :, None, None]

    i1, i2, i3 = conv(w1, b1), conv(w2, b2), conv(w3, b3)
    inner = mem[..., 0] + mem[..., 1] + mem[..., 2]
    xs = (i1, i2, i3, inner)
    outs = []
    for s in range(4):
        outs.append(mem[..., s] * DECAY * (1.0 - spike[..., s]) + xs[s])
    return jnp.stack(outs, axis=-1)


if __name__ == "__main__":
    N, Cin, Cout = 2, 4, 8
    H = W = 16
    KH = KW = 3
    stride, padding = 1, 1
    Ho = (H + 2 * padding - KH) // stride + 1
    Wo = (W + 2 * padding - KW) // stride + 1

    key = jax.random.PRNGKey(0)
    k = jax.random.split(key, 10)

    bound = 1.0 / jnp.sqrt(Cin * KH * KW)
    w1 = jax.random.uniform(k[0], (Cout, Cin, KH, KW), jnp.float32, -bound, bound)
    b1 = jax.random.uniform(k[1], (Cout,), jnp.float32, -bound, bound)
    w2 = jax.random.uniform(k[2], (Cout, Cin, KH, KW), jnp.float32, -bound, bound)
    b2 = jax.random.uniform(k[3], (Cout,), jnp.float32, -bound, bound)
    w3 = jax.random.uniform(k[4], (Cout, Cin, KH, KW), jnp.float32, -bound, bound)
    b3 = jax.random.uniform(k[5], (Cout,), jnp.float32, -bound, bound)

    x = jax.random.bernoulli(k[6], 0.3, (N, Cin, H, W, 4)).astype(jnp.float32)
    mem = jax.random.normal(k[7], (N, Cout, Ho, Wo, 4), jnp.float32) * 0.5
    spike = jax.random.bernoulli(k[8], 0.5, (N, Cout, Ho, Wo, 4)).astype(jnp.float32)

    # ---- single step through the boundary API vs f32 reference -----------------
    mem1, spike1 = lif_hh_forward(x, mem, spike, w1, b1, w2, b2, w3, b3,
                                  stride=stride, padding=padding)
    jax.block_until_ready((mem1, spike1))

    mem1_ref = _reference_mem1(x, mem, spike, w1, b1, w2, b2, w3, b3,
                               stride=stride, padding=padding)
    spike1_ref = (mem1_ref > THRESH).astype(jnp.float32)

    assert mem1.shape == (N, Cout, Ho, Wo, 4) and spike1.shape == mem1.shape
    # bf16 conv weights/bias -> allow a small deviation vs the f32 reference.
    assert float(jnp.max(jnp.abs(mem1 - mem1_ref))) < 2e-2
    # Spike output must be exactly the thresholding of the kernel's own membrane.
    assert bool(jnp.array_equal(spike1, (mem1 > THRESH).astype(jnp.float32)))
    # Spikes may only disagree with the f32 reference near the threshold.
    mismatch = spike1 != spike1_ref
    assert bool(jnp.all(~mismatch | (jnp.abs(mem1_ref - THRESH) < 2e-2)))

    # ---- 3 recurrent steps on the persistent packed state vs the boundary path --
    plan = make_plan(x.shape, w1.shape, stride, padding)
    w3a = pack_weights(w1, b1, w2, b2, w3, b3, plan)
    mem_t, spk_t = pack_state(mem, spike, plan)
    for _ in range(3):
        mem_t, spk_t = lif_hh_step_packed(x, mem_t, spk_t, w3a, plan=plan)
    mem_p, spk_p = unpack_state(mem_t, spk_t, plan)

    mem_b, spk_b = mem, spike
    for _ in range(3):
        mem_b, spk_b = lif_hh_forward(x, mem_b, spk_b, w1, b1, w2, b2, w3, b3,
                                      stride=stride, padding=padding)
    jax.block_until_ready((mem_p, spk_p, mem_b, spk_b))

    # Same kernel arithmetic either way -> must match bit-for-bit.
    assert bool(jnp.array_equal(mem_p, mem_b))
    assert bool(jnp.array_equal(spk_p, spk_b))

    print("KERNEL_OK")
</pallas_src>

<mosaic_0001>
module attributes {stable_mosaic.version = 11 : i64} {
  func.func @lif_hh_kernel(%arg0: i32, %arg1: memref<48x128xbf16, #tpu.memory_space<vmem>>, %arg2: memref<24x48xbf16, #tpu.memory_space<vmem>>, %arg3: memref<32x128xf32, #tpu.memory_space<vmem>>, %arg4: memref<32x128xbf16, #tpu.memory_space<vmem>>, %arg5: memref<32x128xf32, #tpu.memory_space<vmem>>, %arg6: memref<32x128xbf16, #tpu.memory_space<vmem>>) attributes {dimension_semantics = [#tpu.dimension_semantics<parallel>], iteration_bounds = array<i64: 4>, scalar_prefetch = 0 : i64, scratch_operands = 0 : i64, tpu.core_type = #tpu.core_type<tc>, window_params = [{transform_indices = @transform_0, window_bounds = array<i64: 48, 128>}, {pipeline_mode = #tpu.pipeline_mode<synchronous>, transform_indices = @transform_1, window_bounds = array<i64: 24, 48>}, {transform_indices = @transform_2, window_bounds = array<i64: 32, 128>}, {transform_indices = @transform_3, window_bounds = array<i64: 32, 128>}, {transform_indices = @transform_4, window_bounds = array<i64: 32, 128>}, {transform_indices = @transform_5, window_bounds = array<i64: 32, 128>}]} {
    %c0 = arith.constant 0 : index
    %c0_0 = arith.constant 0 : index
    %0 = vector.load %arg2[%c0, %c0_0] : memref<24x48xbf16, #tpu.memory_space<vmem>>, vector<24x48xbf16>
    %c0_1 = arith.constant 0 : index
    %c0_2 = arith.constant 0 : index
    %1 = vector.load %arg1[%c0_1, %c0_2] : memref<48x128xbf16, #tpu.memory_space<vmem>>, vector<48x128xbf16>
    %cst = arith.constant dense<0.000000e+00> : vector<24x128xf32>
    %2 = tpu.matmul %0, %1, %cst {dimension_numbers = #tpu.dot_dimension_numbers<[1], [0], [0], [1], [0, 0, 1, 1], [], []>} : vector<24x48xbf16>, vector<48x128xbf16>, vector<24x128xf32> -> vector<24x128xf32>
    %c0_3 = arith.constant 0 : index
    %c0_4 = arith.constant 0 : index
    %3 = vector.load %arg3[%c0_3, %c0_4] : memref<32x128xf32, #tpu.memory_space<vmem>>, vector<32x128xf32>
    %c0_5 = arith.constant 0 : index
    %c0_6 = arith.constant 0 : index
    %4 = vector.load %arg4[%c0_5, %c0_6] : memref<32x128xbf16, #tpu.memory_space<vmem>>, vector<32x128xbf16>
    %5 = arith.extf %4 : vector<32x128xbf16> to vector<32x128xf32>
    %6 = vector.extract_strided_slice %3 {offsets = [0, 0], sizes = [8, 128], strides = [1, 1]} : vector<32x128xf32> to vector<8x128xf32>
    %7 = vector.extract_strided_slice %3 {offsets = [8, 0], sizes = [8, 128], strides = [1, 1]} : vector<32x128xf32> to vector<8x128xf32>
    %8 = arith.addf %6, %7 : vector<8x128xf32>
    %9 = vector.extract_strided_slice %3 {offsets = [16, 0], sizes = [8, 128], strides = [1, 1]} : vector<32x128xf32> to vector<8x128xf32>
    %10 = arith.addf %8, %9 : vector<8x128xf32>
    %11 = tpu.concatenate %2, %10 in 0 : vector<24x128xf32>, vector<8x128xf32> -> vector<32x128xf32>
    %cst_7 = arith.constant 2.000000e-01 : f32
    %12 = vector.broadcast %cst_7 : f32 to vector<32x128xf32>
    %13 = arith.mulf %3, %12 : vector<32x128xf32>
    %cst_8 = arith.constant 1.000000e+00 : f32
    %14 = vector.broadcast %cst_8 : f32 to vector<32x128xf32>
    %15 = arith.subf %14, %5 : vector<32x128xf32>
    %16 = arith.mulf %13, %15 : vector<32x128xf32>
    %17 = arith.addf %16, %11 : vector<32x128xf32>
    %c0_9 = arith.constant 0 : index
    %c0_10 = arith.constant 0 : index
    %18 = vector.load %arg5[%c0_9, %c0_10] : memref<32x128xf32, #tpu.memory_space<vmem>>, vector<32x128xf32>
    tpu.vector_store %arg5[%c0_9, %c0_10], %17 {strides = array<i32>} : memref<32x128xf32, #tpu.memory_space<vmem>>, vector<32x128xf32>,
    %cst_11 = arith.constant 3.000000e-01 : f32
    %19 = vector.broadcast %cst_11 : f32 to vector<32x128xf32>
    %20 = arith.cmpf ogt, %17, %19 : vector<32x128xf32>
    %cst_12 = arith.constant 1.000000e+00 : f32
    %cst_13 = arith.constant 0.000000e+00 : f32
    %21 = vector.broadcast %cst_12 : f32 to vector<32x128xf32>
    %22 = vector.broadcast %cst_13 : f32 to vector<32x128xf32>
    %23 = arith.select %20, %21, %22 : vector<32x128xi1>, vector<32x128xf32>
    %24 = arith.truncf %23 : vector<32x128xf32> to vector<32x128xbf16>
    %c0_14 = arith.constant 0 : index
    %c0_15 = arith.constant 0 : index
    %25 = vector.load %arg6[%c0_14, %c0_15] : memref<32x128xbf16, #tpu.memory_space<vmem>>, vector<32x128xbf16>
    tpu.vector_store %arg6[%c0_14, %c0_15], %24 {strides = array<i32>} : memref<32x128xbf16, #tpu.memory_space<vmem>>, vector<32x128xbf16>,
    return
  }
  func.func @transform_0(%arg0: i32) -> (i32, i32) {
    %c0_i32 = arith.constant 0 : i32
    %c0_i32_0 = arith.constant 0 : i32
    return %c0_i32, %arg0 : i32, i32
  }
  func.func @transform_1(%arg0: i32) -> (i32, i32) {
    %c0_i32 = arith.constant 0 : i32
    %c0_i32_0 = arith.constant 0 : i32
    %c0_i32_1 = arith.constant 0 : i32
    return %c0_i32, %c0_i32_0 : i32, i32
  }
  func.func @transform_2(%arg0: i32) -> (i32, i32) {
    %c0_i32 = arith.constant 0 : i32
    %c0_i32_0 = arith.constant 0 : i32
    return %c0_i32, %arg0 : i32, i32
  }
  func.func @transform_3(%arg0: i32) -> (i32, i32) {
    %c0_i32 = arith.constant 0 : i32
    %c0_i32_0 = arith.constant 0 : i32
    return %c0_i32, %arg0 : i32, i32
  }
  func.func @transform_4(%arg0: i32) -> (i32, i32) {
    %c0_i32 = arith.constant 0 : i32
    %c0_i32_0 = arith.constant 0 : i32
    return %c0_i32, %arg0 : i32, i32
  }
  func.func @transform_5(%arg0: i32) -> (i32, i32) {
    %c0_i32 = arith.constant 0 : i32
    %c0_i32_0 = arith.constant 0 : i32
    return %c0_i32, %arg0 : i32, i32
  }
}

</mosaic_0001>

<llo_original>
// kernel: lif_hh_forward.1
$region0: #{lif_hh_forward.1}
  #allocation0 [shape = 'u32[]', space=smem, size = 0x4, offset = 0x4, fixed_abs, tag = 'smem constant byte address 0x4 - core index']
  #allocation1 [shape = 'u32[144,128]{1,0:T(1,128)}', space=vmem, size = 0x12000, scoped, tag = 'internal scratch']
  %s0 = inlined_call_operand.vmem [shape: bf16[48,512], index: 0, kind: input, shape index: {}]
  %s1 = inlined_call_operand.vmem [shape: bf16[24,48], index: 1, kind: input, shape index: {}]
  %s2 = inlined_call_operand.vmem [shape: f32[32,512], index: 2, kind: input, shape index: {}, may-alias: {2,4}]
  %s3 = inlined_call_operand.vmem [shape: bf16[32,512], index: 3, kind: input, shape index: {}, may-alias: {3,5}]
  %s4 = inlined_call_operand.vmem [shape: f32[32,512], index: 4, kind: output, shape index: {0}, may-alias: {2,4}]
  %s5 = inlined_call_operand.vmem [shape: bf16[32,512], index: 5, kind: output, shape index: {1}, may-alias: {3,5}]
  %6 = xla_tuple %s4, %s5
  %s7 = sld [smem:[#allocation0]]
  $region248: #{lif_hh_forward.1} parent=0
    _
  %s9 = ssub.s32 1, %s7
  %s10 = scalar_select 0, %s9, %s7
  $region1: #{lif_hh_forward.1} parent=0
    #allocation2 [shape = 'u8[24576]{0}', space=vmem, size = 0x6000, scoped, tag = 'input window, operand 0']
    #allocation3 [shape = 'u8[32768]{0}', space=vmem, size = 0x8000, scoped, tag = 'input window, operand 2']
    #allocation4 [shape = 'u8[16384]{0}', space=vmem, size = 0x4000, scoped, tag = 'input window, operand 3']
    #allocation5 [shape = 'u8[32768]{0}', space=vmem, size = 0x8000, scoped, tag = 'output window, operand 0']
    #allocation6 [shape = 'u8[16384]{0}', space=vmem, size = 0x4000, scoped, tag = 'output window, operand 1']
    loop: start=0, step=1, limit=6
    $region2: #{lif_hh_forward.1} parent=1 // loop_pre_header
      _
    $region3: #{lif_hh_forward.1} parent=1 // loop_header
      %s12 = sphi 0, %s16
      %p13 = scmp.ge.s32.totalorder %s12, 6
      %s22 = sphi 0, %s24
      %s25 = sphi 0, %s22
      %s26 = sphi 0, %s25
      %s42 = sphi 0, %s26
      %s46 = sphi 0, %s46
      %s48 = sphi 0, %s46
      %s49 = sphi 0, %s48
      %s63 = sphi 0, %s49
      %s69 = sphi 0, %s71
      %s72 = sphi 0, %s69
      %s73 = sphi 0, %s72
      %s89 = sphi 0, %s73
      %s95 = sphi 0, %s97
      %s98 = sphi 0, %s95
      %s99 = sphi 0, %s98
      %s115 = sphi 0, %s99
      %s121 = sphi 0, %s123
      %s124 = sphi 0, %s121
      %s125 = sphi 0, %s124
      %s141 = sphi 0, %s125
      %s147 = sphi 0, %s149
      %s150 = sphi 0, %s147
      %s151 = sphi 0, %s150
      %s167 = sphi 0, %s151
    $region4: #{lif_hh_forward.1} parent=1 // loop_header_branch
      %15 = sbr.rel (%p13) target = $region8
    $region5: #{lif_hh_forward.1} parent=1 // loop_body
      %s17 = ssub.s32 %s12, 1
      %s18 = ssub.s32 %s12, 2
      %s19 = sadd.s32 %s12, 1
      %s20 = ssub.s32 %s12, %s19
      %p21 = scmp.eq.s32.totalorder %s20, 0
      %s23 = sadd.s32 %s22, 1
      %s24 = scalar_select %p21, %s22, %s23
      %p27 = pneg %p21
      %p28 = scmp.eq.s32.totalorder %s12, 3
      %p29 = por %p27, %p28
      %p30 = scmp.ne.s32.totalorder %s22, %s25
      %p31 = scmp.eq.s32.totalorder %s12, 0
      %p32 = por %p30, %p31
      %p33 = scmp.ne.s32.totalorder %s22, %s25
      %p34 = scmp.eq.s32.totalorder %s17, 3
      %p35 = por %p33, %p34
      %p36 = scmp.ne.s32.totalorder %s25, %s26
      %p37 = scmp.eq.s32.totalorder %s17, 0
      %p38 = por %p36, %p37
      %p39 = scmp.ne.s32.totalorder %s25, %s26
      %p40 = scmp.eq.s32.totalorder %s18, 3
      %p41 = por %p39, %p40
      %p43 = scmp.ne.s32.totalorder %s26, %s42
      %p44 = scmp.eq.s32.totalorder %s18, 0
      %p45 = por %p43, %p44
      %s47 = sadd.s32 %s46, 1
      %p50 = scmp.eq.s32.totalorder %s12, 3
      %p51 = scmp.ne.s32.totalorder %s46, %s48
      %p52 = scmp.eq.s32.totalorder %s12, 0
      %p53 = por %p51, %p52
      %p54 = scmp.ne.s32.totalorder %s46, %s48
      %p55 = scmp.eq.s32.totalorder %s17, 3
      %p56 = por %p54, %p55
      %p57 = scmp.ne.s32.totalorder %s48, %s49
      %p58 = scmp.eq.s32.totalorder %s17, 0
      %p59 = por %p57, %p58
      %p60 = scmp.ne.s32.totalorder %s48, %s49
      %p61 = scmp.eq.s32.totalorder %s18, 3
      %p62 = por %p60, %p61
      %p64 = scmp.ne.s32.totalorder %s49, %s63
      %p65 = scmp.eq.s32.totalorder %s18, 0
      %p66 = por %p64, %p65
      %s67 = ssub.s32 %s12, %s19
      %p68 = scmp.eq.s32.totalorder %s67, 0
      %s70 = sadd.s32 %s69, 1
      %s71 = scalar_select %p68, %s69, %s70
      %p74 = pneg %p68
      %p75 = scmp.eq.s32.totalorder %s12, 3
      %p76 = por %p74, %p75
      %p77 = scmp.ne.s32.totalorder %s69, %s72
      %p78 = scmp.eq.s32.totalorder %s12, 0
      %p79 = por %p77, %p78
      %p80 = scmp.ne.s32.totalorder %s69, %s72
      %p81 = scmp.eq.s32.totalorder %s17, 3
      %p82 = por %p80, %p81
      %p83 = scmp.ne.s32.totalorder %s72, %s73
      %p84 = scmp.eq.s32.totalorder %s17, 0
      %p85 = por %p83, %p84
      %p86 = scmp.ne.s32.totalorder %s72, %s73
      %p87 = scmp.eq.s32.totalorder %s18, 3
      %p88 = por %p86, %p87
      %p90 = scmp.ne.s32.totalorder %s73, %s89
      %p91 = scmp.eq.s32.totalorder %s18, 0
      %p92 = por %p90, %p91
      %s93 = ssub.s32 %s12, %s19
      %p94 = scmp.eq.s32.totalorder %s93, 0
      %s96 = sadd.s32 %s95, 1
      %s97 = scalar_select %p94, %s95, %s96
      %p100 = pneg %p94
      %p101 = scmp.eq.s32.totalorder %s12, 3
      %p102 = por %p100, %p101
      %p103 = scmp.ne.s32.totalorder %s95, %s98
      %p104 = scmp.eq.s32.totalorder %s12, 0
      %p105 = por %p103, %p104
      %p106 = scmp.ne.s32.totalorder %s95, %s98
      %p107 = scmp.eq.s32.totalorder %s17, 3
      %p108 = por %p106, %p107
      %p109 = scmp.ne.s32.totalorder %s98, %s99
      %p110 = scmp.eq.s32.totalorder %s17, 0
      %p111 = por %p109, %p110
      %p112 = scmp.ne.s32.totalorder %s98, %s99
      %p113 = scmp.eq.s32.totalorder %s18, 3
      %p114 = por %p112, %p113
      %p116 = scmp.ne.s32.totalorder %s99, %s115
      %p117 = scmp.eq.s32.totalorder %s18, 0
      %p118 = por %p116, %p117
      %s119 = ssub.s32 %s12, %s19
      %p120 = scmp.eq.s32.totalorder %s119, 0
      %s122 = sadd.s32 %s121, 1
      %s123 = scalar_select %p120, %s121, %s122
      %p126 = pneg %p120
      %p127 = scmp.eq.s32.totalorder %s12, 3
      %p128 = por %p126, %p127
      %p129 = scmp.ne.s32.totalorder %s121, %s124
      %p130 = scmp.eq.s32.totalorder %s12, 0
      %p131 = por %p129, %p130
      %p132 = scmp.ne.s32.totalorder %s121, %s124
      %p133 = scmp.eq.s32.totalorder %s17, 3
      %p134 = por %p132, %p133
      %p135 = scmp.ne.s32.totalorder %s124, %s125
      %p136 = scmp.eq.s32.totalorder %s17, 0
      %p137 = por %p135, %p136
      %p138 = scmp.ne.s32.totalorder %s124, %s125
      %p139 = scmp.eq.s32.totalorder %s18, 3
      %p140 = por %p138, %p139
      %p142 = scmp.ne.s32.totalorder %s125, %s141
      %p143 = scmp.eq.s32.totalorder %s18, 0
      %p144 = por %p142, %p143
      %s145 = ssub.s32 %s12, %s19
      %p146 = scmp.eq.s32.totalorder %s145, 0
      %s148 = sadd.s32 %s147, 1
      %s149 = scalar_select %p146, %s147, %s148
      %p152 = pneg %p146
      %p153 = scmp.eq.s32.totalorder %s12, 3
      %p154 = por %p152, %p153
      %p155 = scmp.ne.s32.totalorder %s147, %s150
      %p156 = scmp.eq.s32.totalorder %s12, 0
      %p157 = por %p155, %p156
      %p158 = scmp.ne.s32.totalorder %s147, %s150
      %p159 = scmp.eq.s32.totalorder %s17, 3
      %p160 = por %p158, %p159
      %p161 = scmp.ne.s32.totalorder %s150, %s151
      %p162 = scmp.eq.s32.totalorder %s17, 0
      %p163 = por %p161, %p162
      %p164 = scmp.ne.s32.totalorder %s150, %s151
      %p165 = scmp.eq.s32.totalorder %s18, 3
      %p166 = por %p164, %p165
      %p168 = scmp.ne.s32.totalorder %s151, %s167
      %p169 = scmp.eq.s32.totalorder %s18, 0
      %p170 = por %p168, %p169
      %p171 = scmp.le.s32.totalorder 1, %s12
      %p172 = scmp.lt.s32.totalorder %s12, 5
      %p173 = pnand %p171, %p172
      %p174 = pneg %p173
      // Predicated region
      $region9: #{lif_hh_forward.1} parent=5 // pred_check
        _
      $region10: #{lif_hh_forward.1} parent=5 // pred_check_branch
        %176 = sbr.rel (%p173) target = $region12
      $region11: #{lif_hh_forward.1} parent=5 // pred_region
        %s177 = ssub.s32 %s12, 1
        // Predicated region
        $region13: #{lif_hh_forward.1} parent=11 // pred_check
          %p178 = pneg %p59
        $region14: #{lif_hh_forward.1} parent=11 // pred_check_branch
          %180 = sbr.rel (%p178) target = $region16
        $region15: #{lif_hh_forward.1} parent=11 // pred_region
          _
        $region16: #{lif_hh_forward.1} parent=11 // pred_fallthru
          _
      $region12: #{lif_hh_forward.1} parent=5 // pred_fallthru
        _
      %p181 = scmp.lt.s32.totalorder %s12, 4
      // Predicated region
      $region17: #{lif_hh_forward.1} parent=5 // pred_check
        %p182 = pneg %p181
      $region18: #{lif_hh_forward.1} parent=5 // pred_check_branch
        %184 = sbr.rel (%p182) target = $region20
      $region19: #{lif_hh_forward.1} parent=5 // pred_region
        // Predicated region
        $region21: #{lif_hh_forward.1} parent=19 // pred_check
          %p185 = pneg %p32
        $region22: #{lif_hh_forward.1} parent=19 // pred_check_branch
          %187 = sbr.rel (%p185) target = $region24
        $region23: #{lif_hh_forward.1} parent=19 // pred_region
          %s188 = sand.u32 %s22, 1
          %s189 = sand.u32 %s22, 1
          %s190 = smul.addr %s189, 24
          %s191 = scalar_lea.vmem [#allocation2], %s190
          %s192 = smul.addr %s12, 4
          %s193 = scalar_lea.vmem %s0, %s192
          // Predicated region
          $region25: #{lif_hh_forward.1} parent=23 // pred_check
            _
          $region26: #{lif_hh_forward.1} parent=23 // pred_check_branch
            %195 = sbr.rel (0) target = $region28
          $region27: #{lif_hh_forward.1} parent=23 // pred_region
            // Predicated region
            $region29: #{lif_hh_forward.1} parent=27 // pred_check
              _
            $region30: #{lif_hh_forward.1} parent=27 // pred_check_branch
              %197 = sbr.rel target = $region32
            $region31: #{lif_hh_forward.1} parent=27 // pred_region
              // Predicated region
              $region44: #{lif_hh_forward.1} parent=31 // pred_check
                _
              $region45: #{lif_hh_forward.1} parent=31 // pred_check_branch
                %222 = sbr.rel (0) target = $region47
              $region46: #{lif_hh_forward.1} parent=31 // pred_region
                loop: start=0, step=1, limit=1
                $region48: #{lif_hh_forward.1} parent=46 // loop_pre_header
                  _
                $region49: #{lif_hh_forward.1} parent=46 // loop_header
                  %s224 = sphi 0, %s228
                  %p225 = scmp.ge.s32.totalorder %s224, 1
                  %s229 = sphi %s193, %s193
                  %s230 = sphi %s191, %s191
                $region50: #{lif_hh_forward.1} parent=46 // loop_header_branch
                  %227 = sbr.rel (%p225) target = $region54
                $region51: #{lif_hh_forward.1} parent=46 // loop_body
                  _
                $region52: #{lif_hh_forward.1} parent=46 // loop_footer
                  %s228 = sadd.s32 1, %s224
                $region53: #{lif_hh_forward.1} parent=46 // loop_footer_branch
                  %223 = sbr.rel target = $region49
                $region54: #{lif_hh_forward.1} parent=46 // loop_exit
                  _
                loop: start=0, step=1, limit=1
                $region55: #{lif_hh_forward.1} parent=46 // loop_pre_header
                  _
                $region56: #{lif_hh_forward.1} parent=46 // loop_header
                  %s233 = sphi 0, %s237
                  %p234 = scmp.ge.s32.totalorder %s233, 1
                  %s238 = sphi %s193, %s193
                  %s239 = sphi %s191, %s191
                $region57: #{lif_hh_forward.1} parent=46 // loop_header_branch
                  %236 = sbr.rel (%p234) target = $region61
                $region58: #{lif_hh_forward.1} parent=46 // loop_body
                  %v240 = vld [vmem:[%s238] sm:$0xf]
                  %241 = vst [vmem:[%s239] sm:$0xf] %v240
                  %v242 = vld [vmem:[%s238 + $0x10] sm:$0xf]
                  %243 = vst [vmem:[%s239 + $0x4] sm:$0xf] %v242
                  %v244 = vld [vmem:[%s238 + $0x20] sm:$0xf]
                  %245 = vst [vmem:[%s239 + $0x8] sm:$0xf] %v244
                  %v246 = vld [vmem:[%s238 + $0x30] sm:$0xf]
                  %247 = vst [vmem:[%s239 + $0xc] sm:$0xf] %v246
                  %v248 = vld [vmem:[%s238 + $0x40] sm:$0xf]
                  %249 = vst [vmem:[%s239 + $0x10] sm:$0xf] %v248
                  %v250 = vld [vmem:[%s238 + $0x50] sm:$0xf]
                  %251 = vst [vmem:[%s239 + $0x14] sm:$0xf] %v250
                $region59: #{lif_hh_forward.1} parent=46 // loop_footer
                  %s237 = sadd.s32 1, %s233
                $region60: #{lif_hh_forward.1} parent=46 // loop_footer_branch
                  %232 = sbr.rel target = $region56
                $region61: #{lif_hh_forward.1} parent=46 // loop_exit
                  _
              $region47: #{lif_hh_forward.1} parent=31 // pred_fallthru
                _
            $region32: #{lif_hh_forward.1} parent=27 // pred_fallthru
              _
            // Predicated region
            $region33: #{lif_hh_forward.1} parent=27 // pred_check
              _
            $region34: #{lif_hh_forward.1} parent=27 // pred_check_branch
              %199 = sbr.rel (0) target = $region36
            $region35: #{lif_hh_forward.1} parent=27 // pred_region
              loop: start=0, step=1, limit=1
              $region37: #{lif_hh_forward.1} parent=35 // loop_pre_header
                _
              $region38: #{lif_hh_forward.1} parent=35 // loop_header
                %s202 = sphi 0, %s206
                %p203 = scmp.ge.s32.totalorder %s202, 1
                %s207 = sphi %s193, %s193
                %s208 = sphi %s191, %s191
              $region39: #{lif_hh_forward.1} parent=35 // loop_header_branch
                %205 = sbr.rel (%p203) target = $region43
              $region40: #{lif_hh_forward.1} parent=35 // loop_body
                %v209 = vld [vmem:[%s207] sm:$0xf]
                %210 = vst [vmem:[%s208] sm:$0xf] %v209
                %v211 = vld [vmem:[%s207 + $0x10] sm:$0xf]
                %212 = vst [vmem:[%s208 + $0x4] sm:$0xf] %v211
                %v213 = vld [vmem:[%s207 + $0x20] sm:$0xf]
                %214 = vst [vmem:[%s208 + $0x8] sm:$0xf] %v213
                %v215 = vld [vmem:[%s207 + $0x30] sm:$0xf]
                %216 = vst [vmem:[%s208 + $0xc] sm:$0xf] %v215
                %v217 = vld [vmem:[%s207 + $0x40] sm:$0xf]
                %218 = vst [vmem:[%s208 + $0x10] sm:$0xf] %v217
                %v219 = vld [vmem:[%s207 + $0x50] sm:$0xf]
                %220 = vst [vmem:[%s208 + $0x14] sm:$0xf] %v219
              $region41: #{lif_hh_forward.1} parent=35 // loop_footer
                %s206 = sadd.s32 1, %s202
              $region42: #{lif_hh_forward.1} parent=35 // loop_footer_branch
                %201 = sbr.rel target = $region38
              $region43: #{lif_hh_forward.1} parent=35 // loop_exit
                _
            $region36: #{lif_hh_forward.1} parent=27 // pred_fallthru
              _
          $region28: #{lif_hh_forward.1} parent=23 // pred_fallthru
            _
          %252 = vnop
        $region24: #{lif_hh_forward.1} parent=19 // pred_fallthru
          _
        // Predicated region
        $region62: #{lif_hh_forward.1} parent=19 // pred_check
          %p253 = pneg %p79
        $region63: #{lif_hh_forward.1} parent=19 // pred_check_branch
          %255 = sbr.rel (%p253) target = $region65
        $region64: #{lif_hh_forward.1} parent=19 // pred_region
          %s256 = sand.u32 %s69, 1
          %s257 = sand.u32 %s69, 1
          %s258 = smul.addr %s257, 32
          %s259 = scalar_lea.vmem [#allocation3], %s258
          %s260 = smul.addr %s12, 8
          %s261 = scalar_lea.vmem %s2, %s260
          // Predicated region
          $region66: #{lif_hh_forward.1} parent=64 // pred_check
            _
          $region67: #{lif_hh_forward.1} parent=64 // pred_check_branch
            %263 = sbr.rel (0) target = $region69
          $region68: #{lif_hh_forward.1} parent=64 // pred_region
            // Predicated region
            $region70: #{lif_hh_forward.1} parent=68 // pred_check
              _
            $region71: #{lif_hh_forward.1} parent=68 // pred_check_branch
              %265 = sbr.rel (0) target = $region73
            $region72: #{lif_hh_forward.1} parent=68 // pred_region
              // Predicated region
              $region85: #{lif_hh_forward.1} parent=72 // pred_check
                _
              $region86: #{lif_hh_forward.1} parent=72 // pred_check_branch
                %286 = sbr.rel (0) target = $region88
              $region87: #{lif_hh_forward.1} parent=72 // pred_region
                loop: start=0, step=1, limit=1
                $region89: #{lif_hh_forward.1} parent=87 // loop_pre_header
                  _
                $region90: #{lif_hh_forward.1} parent=87 // loop_header
                  %s288 = sphi 0, %s292
                  %p289 = scmp.ge.s32.totalorder %s288, 1
                  %s293 = sphi %s261, %s261
                  %s294 = sphi %s259, %s259
                $region91: #{lif_hh_forward.1} parent=87 // loop_header_branch
                  %291 = sbr.rel (%p289) target = $region95
                $region92: #{lif_hh_forward.1} parent=87 // loop_body
                  %v295 = vld [vmem:[%s293] sm:$0xff]
                  %296 = vst [vmem:[%s294] sm:$0xff] %v295
                  %v297 = vld [vmem:[%s293 + $0x20] sm:$0xff]
                  %298 = vst [vmem:[%s294 + $0x8] sm:$0xff] %v297
                  %v299 = vld [vmem:[%s293 + $0x40] sm:$0xff]
                  %300 = vst [vmem:[%s294 + $0x10] sm:$0xff] %v299
                  %v301 = vld [vmem:[%s293 + $0x60] sm:$0xff]
                  %302 = vst [vmem:[%s294 + $0x18] sm:$0xff] %v301
                $region93: #{lif_hh_forward.1} parent=87 // loop_footer
                  %s292 = sadd.s32 1, %s288
                $region94: #{lif_hh_forward.1} parent=87 // loop_footer_branch
                  %287 = sbr.rel target = $region90
                $region95: #{lif_hh_forward.1} parent=87 // loop_exit
                  _
              $region88: #{lif_hh_forward.1} parent=72 // pred_fallthru
                _
              // Predicated region
              $region96: #{lif_hh_forward.1} parent=72 // pred_check
                _
              $region97: #{lif_hh_forward.1} parent=72 // pred_check_branch
                %304 = sbr.rel target = $region99
              $region98: #{lif_hh_forward.1} parent=72 // pred_region
                _
              $region99: #{lif_hh_forward.1} parent=72 // pred_fallthru
                _
            $region73: #{lif_hh_forward.1} parent=68 // pred_fallthru
              _
            // Predicated region
            $region74: #{lif_hh_forward.1} parent=68 // pred_check
              _
            $region75: #{lif_hh_forward.1} parent=68 // pred_check_branch
              %267 = sbr.rel target = $region77
            $region76: #{lif_hh_forward.1} parent=68 // pred_region
              loop: start=0, step=1, limit=1
              $region78: #{lif_hh_forward.1} parent=76 // loop_pre_header
                _
              $region79: #{lif_hh_forward.1} parent=76 // loop_header
                %s270 = sphi 0, %s274
                %p271 = scmp.ge.s32.totalorder %s270, 1
                %s275 = sphi %s261, %s261
                %s276 = sphi %s259, %s259
              $region80: #{lif_hh_forward.1} parent=76 // loop_header_branch
                %273 = sbr.rel (%p271) target = $region84
              $region81: #{lif_hh_forward.1} parent=76 // loop_body
                %v277 = vld [vmem:[%s275] sm:$0xff]
                %278 = vst [vmem:[%s276] sm:$0xff] %v277
                %v279 = vld [vmem:[%s275 + $0x20] sm:$0xff]
                %280 = vst [vmem:[%s276 + $0x8] sm:$0xff] %v279
                %v281 = vld [vmem:[%s275 + $0x40] sm:$0xff]
                %282 = vst [vmem:[%s276 + $0x10] sm:$0xff] %v281
                %v283 = vld [vmem:[%s275 + $0x60] sm:$0xff]
                %284 = vst [vmem:[%s276 + $0x18] sm:$0xff] %v283
              $region82: #{lif_hh_forward.1} parent=76 // loop_footer
                %s274 = sadd.s32 1, %s270
              $region83: #{lif_hh_forward.1} parent=76 // loop_footer_branch
                %269 = sbr.rel target = $region79
              $region84: #{lif_hh_forward.1} parent=76 // loop_exit
                _
            $region77: #{lif_hh_forward.1} parent=68 // pred_fallthru
              _
          $region69: #{lif_hh_forward.1} parent=64 // pred_fallthru
            _
          %305 = vnop
        $region65: #{lif_hh_forward.1} parent=19 // pred_fallthru
          _
        // Predicated region
        $region100: #{lif_hh_forward.1} parent=19 // pred_check
          %p306 = pneg %p105
        $region101: #{lif_hh_forward.1} parent=19 // pred_check_branch
          %308 = sbr.rel (%p306) target = $region103
        $region102: #{lif_hh_forward.1} parent=19 // pred_region
          %s309 = sand.u32 %s95, 1
          %s310 = sand.u32 %s95, 1
          %s311 = smul.addr %s310, 16
          %s312 = scalar_lea.vmem [#allocation4], %s311
          %s313 = smul.addr %s12, 4
          %s314 = scalar_lea.vmem %s3, %s313
          // Predicated region
          $region104: #{lif_hh_forward.1} parent=102 // pred_check
            _
          $region105: #{lif_hh_forward.1} parent=102 // pred_check_branch
            %316 = sbr.rel (0) target = $region107
          $region106: #{lif_hh_forward.1} parent=102 // pred_region
            // Predicated region
            $region108: #{lif_hh_forward.1} parent=106 // pred_check
              _
            $region109: #{lif_hh_forward.1} parent=106 // pred_check_branch
              %318 = sbr.rel target = $region111
            $region110: #{lif_hh_forward.1} parent=106 // pred_region
              // Predicated region
              $region123: #{lif_hh_forward.1} parent=110 // pred_check
                _
              $region124: #{lif_hh_forward.1} parent=110 // pred_check_branch
                %339 = sbr.rel (0) target = $region126
              $region125: #{lif_hh_forward.1} parent=110 // pred_region
                loop: start=0, step=1, limit=1
                $region127: #{lif_hh_forward.1} parent=125 // loop_pre_header
                  _
                $region128: #{lif_hh_forward.1} parent=125 // loop_header
                  %s341 = sphi 0, %s345
                  %p342 = scmp.ge.s32.totalorder %s341, 1
                  %s346 = sphi %s314, %s314
                  %s347 = sphi %s312, %s312
                $region129: #{lif_hh_forward.1} parent=125 // loop_header_branch
                  %344 = sbr.rel (%p342) target = $region133
                $region130: #{lif_hh_forward.1} parent=125 // loop_body
                  _
                $region131: #{lif_hh_forward.1} parent=125 // loop_footer
                  %s345 = sadd.s32 1, %s341
                $region132: #{lif_hh_forward.1} parent=125 // loop_footer_branch
                  %340 = sbr.rel target = $region128
                $region133: #{lif_hh_forward.1} parent=125 // loop_exit
                  _
                loop: start=0, step=1, limit=1
                $region134: #{lif_hh_forward.1} parent=125 // loop_pre_header
                  _
                $region135: #{lif_hh_forward.1} parent=125 // loop_header
                  %s350 = sphi 0, %s354
                  %p351 = scmp.ge.s32.totalorder %s350, 1
                  %s355 = sphi %s314, %s314
                  %s356 = sphi %s312, %s312
                $region136: #{lif_hh_forward.1} parent=125 // loop_header_branch
                  %353 = sbr.rel (%p351) target = $region140
                $region137: #{lif_hh_forward.1} parent=125 // loop_body
                  %v357 = vld [vmem:[%s355] sm:$0xf]
                  %358 = vst [vmem:[%s356] sm:$0xf] %v357
                  %v359 = vld [vmem:[%s355 + $0x10] sm:$0xf]
                  %360 = vst [vmem:[%s356 + $0x4] sm:$0xf] %v359
                  %v361 = vld [vmem:[%s355 + $0x20] sm:$0xf]
                  %362 = vst [vmem:[%s356 + $0x8] sm:$0xf] %v361
                  %v363 = vld [vmem:[%s355 + $0x30] sm:$0xf]
                  %364 = vst [vmem:[%s356 + $0xc] sm:$0xf] %v363
                $region138: #{lif_hh_forward.1} parent=125 // loop_footer
                  %s354 = sadd.s32 1, %s350
                $region139: #{lif_hh_forward.1} parent=125 // loop_footer_branch
                  %349 = sbr.rel target = $region135
                $region140: #{lif_hh_forward.1} parent=125 // loop_exit
                  _
              $region126: #{lif_hh_forward.1} parent=110 // pred_fallthru
                _
            $region111: #{lif_hh_forward.1} parent=106 // pred_fallthru
              _
            // Predicated region
            $region112: #{lif_hh_forward.1} parent=106 // pred_check
              _
            $region113: #{lif_hh_forward.1} parent=106 // pred_check_branch
              %320 = sbr.rel (0) target = $region115
            $region114: #{lif_hh_forward.1} parent=106 // pred_region
              loop: start=0, step=1, limit=1
              $region116: #{lif_hh_forward.1} parent=114 // loop_pre_header
                _
              $region117: #{lif_hh_forward.1} parent=114 // loop_header
                %s323 = sphi 0, %s327
                %p324 = scmp.ge.s32.totalorder %s323, 1
                %s328 = sphi %s314, %s314
                %s329 = sphi %s312, %s312
              $region118: #{lif_hh_forward.1} parent=114 // loop_header_branch
                %326 = sbr.rel (%p324) target = $region122
              $region119: #{lif_hh_forward.1} parent=114 // loop_body
                %v330 = vld [vmem:[%s328] sm:$0xf]
                %331 = vst [vmem:[%s329] sm:$0xf] %v330
                %v332 = vld [vmem:[%s328 + $0x10] sm:$0xf]
                %333 = vst [vmem:[%s329 + $0x4] sm:$0xf] %v332
                %v334 = vld [vmem:[%s328 + $0x20] sm:$0xf]
                %335 = vst [vmem:[%s329 + $0x8] sm:$0xf] %v334
                %v336 = vld [vmem:[%s328 + $0x30] sm:$0xf]
                %337 = vst [vmem:[%s329 + $0xc] sm:$0xf] %v336
              $region120: #{lif_hh_forward.1} parent=114 // loop_footer
                %s327 = sadd.s32 1, %s323
              $region121: #{lif_hh_forward.1} parent=114 // loop_footer_branch
                %322 = sbr.rel target = $region117
              $region122: #{lif_hh_forward.1} parent=114 // loop_exit
                _
            $region115: #{lif_hh_forward.1} parent=106 // pred_fallthru
              _
          $region107: #{lif_hh_forward.1} parent=102 // pred_fallthru
            _
          %365 = vnop
        $region103: #{lif_hh_forward.1} parent=19 // pred_fallthru
          _
      $region20: #{lif_hh_forward.1} parent=5 // pred_fallthru
        _
      %p366 = scmp.le.s32.totalorder 1, %s12
      %p367 = scmp.lt.s32.totalorder %s12, 5
      %p368 = pnand %p366, %p367
      %p369 = pneg %p368
      // Predicated region
      $region141: #{lif_hh_forward.1} parent=5 // pred_check
        _
      $region142: #{lif_hh_forward.1} parent=5 // pred_check_branch
        %371 = sbr.rel (%p368) target = $region144
      $region143: #{lif_hh_forward.1} parent=5 // pred_region
        %s372 = ssub.s32 %s12, 1
        %s373 = sand.u32 %s25, 1
        %s374 = sand.u32 %s25, 1
        %s375 = smul.addr %s374, 24
        %s376 = scalar_lea.vmem [#allocation2], %s375
        // Predicated region
        $region145: #{lif_hh_forward.1} parent=143 // pred_check
          %p377 = pneg %p38
        $region146: #{lif_hh_forward.1} parent=143 // pred_check_branch
          %379 = sbr.rel (%p377) target = $region148
        $region147: #{lif_hh_forward.1} parent=143 // pred_region
          _
        $region148: #{lif_hh_forward.1} parent=143 // pred_fallthru
          _
        %s380 = sand.u32 %s72, 1
        %s381 = sand.u32 %s72, 1
        %s382 = smul.addr %s381, 32
        %s383 = scalar_lea.vmem [#allocation3], %s382
        // Predicated region
        $region149: #{lif_hh_forward.1} parent=143 // pred_check
          %p384 = pneg %p85
        $region150: #{lif_hh_forward.1} parent=143 // pred_check_branch
          %386 = sbr.rel (%p384) target = $region152
        $region151: #{lif_hh_forward.1} parent=143 // pred_region
          _
        $region152: #{lif_hh_forward.1} parent=143 // pred_fallthru
          _
        %s387 = sand.u32 %s98, 1
        %s388 = sand.u32 %s98, 1
        %s389 = smul.addr %s388, 16
        %s390 = scalar_lea.vmem [#allocation4], %s389
        // Predicated region
        $region153: #{lif_hh_forward.1} parent=143 // pred_check
          %p391 = pneg %p111
        $region154: #{lif_hh_forward.1} parent=143 // pred_check_branch
          %393 = sbr.rel (%p391) target = $region156
        $region155: #{lif_hh_forward.1} parent=143 // pred_region
          _
        $region156: #{lif_hh_forward.1} parent=143 // pred_fallthru
          _
        %s394 = sand.u32 %s25, 1
        %s395 = sand.u32 %s25, 1
        %s396 = smul.addr %s395, 24
        %s397 = scalar_lea.vmem [#allocation2], %s396
        %p398 = pneg %p38
        %p399 = pneg %p35
        %p400 = pneg %p59
        %p401 = pneg %p56
        %s402 = sand.u32 %s72, 1
        %s403 = sand.u32 %s72, 1
        %s404 = smul.addr %s403, 32
        %s405 = scalar_lea.vmem [#allocation3], %s404
        %p406 = pneg %p85
        %p407 = pneg %p82
        %s408 = sand.u32 %s98, 1
        %s409 = sand.u32 %s98, 1
        %s410 = smul.addr %s409, 16
        %s411 = scalar_lea.vmem [#allocation4], %s410
        %p412 = pneg %p111
        %p413 = pneg %p108
        %p414 = pneg %p137
        %p415 = pneg %p134
        %s416 = sand.u32 %s124, 1
        %s417 = sand.u32 %s124, 1
        %s418 = smul.addr %s417, 32
        %s419 = scalar_lea.vmem [#allocation5], %s418
        %p420 = pneg %p163
        %p421 = pneg %p160
        %s422 = sand.u32 %s150, 1
        %s423 = sand.u32 %s150, 1
        %s424 = smul.addr %s423, 16
        %s425 = scalar_lea.vmem [#allocation6], %s424
        %v427 = vld [vmem:[%s1] sm:$0xf]
        %v428 = vld [vmem:[%s1 + $0x4] sm:$0xf]
        %v429 = vld [vmem:[%s1 + $0x8] sm:$0xf]
        %v430 = vld [vmem:[%s376] sm:$0xf]
        %v431 = vld [vmem:[%s376 + $0x4] sm:$0xf]
        %v432 = vld [vmem:[%s376 + $0x8] sm:$0xf]
        %v433 = vld [vmem:[%s376 + $0xc] sm:$0xf]
        %v434 = vld [vmem:[%s376 + $0x10] sm:$0xf]
        %v435 = vld [vmem:[%s376 + $0x14] sm:$0xf]
        %v439 = vunpack.c.l.b16 %v427
        %v440 = vunpack.c.l.b16 %v428
        %v441 = vunpack.c.l.b16 %v429
        %v442 = vpack.c.b16 %v440, %v439
        %v443 = vpack.c.b16 %v441, %v441
        %v450 = vunpack.c.l.b16 %v430
        %v451 = vunpack.c.l.b16 %v431
        %v452 = vunpack.c.l.b16 %v432
        %v453 = vunpack.c.l.b16 %v433
        %v454 = vunpack.c.l.b16 %v434
        %v455 = vunpack.c.l.b16 %v435
        %v456 = vpack.c.b16 %v451, %v450
        %v457 = vpack.c.b16 %v453, %v452
        %v458 = vpack.c.b16 %v455, %v454
        %vm462 = vcmask 392192
        %v464 = vsel %vm462, %v442, 0
        %v467 = vsel %vm462, %v443, 0
        %469 = vmatprep.subr.bf16.mxu0 0
        %470 = vmatpush1.bf16.msra.mxu0 %v456
        %471 = vmatprep.subr.bf16.mxu0 0
        %472 = vmatpush1.bf16.msra.mxu0 %v457
        %473 = vmatprep.subr.bf16.mxu0 0
        %474 = vmatpush1.bf16.msra.mxu0 %v458
        %475 = vmatprep.subr.bf16.mxu0 0
        %476 = vmatpush1.bf16.msra.mxu0 0
        %477 = vmatprep.subr.bf16.mxu0 0
        %478 = vmatpush1.bf16.msra.mxu0 0
        %479 = vmatprep.subr.bf16.mxu0 0
        %480 = vmatpush1.bf16.msra.mxu0 0
        %481 = vmatprep.subr.bf16.mxu0 0
        %482 = vmatpush1.bf16.msra.mxu0 0
        %483 = vmatprep.subr.bf16.mxu0 0
        %484 = vmatpush1.bf16.msra.mxu0 0
        %485 = vmatprep.subr.bf16.mxu0 0
        %486 = vmatpush1.bf16.msra.mxu0 0
        %487 = vmatprep.subr.bf16.mxu0 0
        %488 = vmatpush1.bf16.msra.mxu0 0
        %489 = vmatprep.subr.bf16.mxu0 0
        %490 = vmatpush1.bf16.msra.mxu0 0
        %491 = vmatprep.subr.bf16.mxu0 0
        %492 = vmatpush1.bf16.msra.mxu0 0
        %493 = vmatprep.subr.bf16.mxu0 0
        %494 = vmatpush1.bf16.msra.mxu0 0
        %495 = vmatprep.subr.bf16.mxu0 0
        %496 = vmatpush1.bf16.msra.mxu0 0
        %497 = vmatprep.subr.bf16.mxu0 0
        %498 = vmatpush1.bf16.msra.mxu0 0
        %499 = vmatprep.subr.bf16.mxu0 0
        %500 = vmatpush1.bf16.msra.mxu0 0
        %501 = vmatprep.mubr.bf16.mxu0 0
        %502 = vmatmul.mubr.bf16.gmra.mrb[0].mxu0 %v464
        %v503 = vpop.f32.mrb[0].mxu0
        %v504 = vadd.f32 0.0, %v503
        %v505 = vpop.f32.mrb[0].mxu0
        %v506 = vpop.f32.mrb[0].mxu0
        %v507 = vadd.f32 0.0, %v506
        %v508 = vpop.f32.mrb[0].mxu0
        %509 = vmatprep.mubr.bf16.mxu0 0
        %510 = vmatmul.mubr.bf16.gmra.mrb[0].mxu0 %v467
        %v511 = vpop.f32.mrb[0].mxu0
        %v512 = vadd.f32 0.0, %v511
        %v513 = vpop.f32.mrb[0].mxu0
        %v514 = vpop.f32.mrb[0].mxu0
        %v515 = vpop.f32.mrb[0].mxu0
        %516 = vdwg.mxu0
        %v517 = vld [vmem:[%s383] sm:$0xff]
        %v518 = vld [vmem:[%s383 + $0x8] sm:$0xff]
        %v519 = vld [vmem:[%s383 + $0x10] sm:$0xff]
        %v520 = vld [vmem:[%s383 + $0x18] sm:$0xff]
        %v521 = vld [vmem:[%s390] sm:$0xf]
        %v522 = vld [vmem:[%s390 + $0x4] sm:$0xf]
        %v523 = vld [vmem:[%s390 + $0x8] sm:$0xf]
        %v524 = vld [vmem:[%s390 + $0xc] sm:$0xf]
        %v525 = vunpack.c.l.bf16 %v521
        %v526 = vunpack.c.l.bf16 %v522
        %v527 = vunpack.c.l.bf16 %v523
        %v528 = vunpack.c.l.bf16 %v524
        %v529 = vadd.f32 %v517, %v518
        %v530 = vadd.f32 %v529, %v519
        %v531 = vmul.f32 %v517, 0.2
        %v532 = vmul.f32 %v518, 0.2
        %v533 = vmul.f32 %v519, 0.2
        %v534 = vmul.f32 %v520, 0.2
        %v535 = vsub.f32 1.0, %v525
        %v536 = vsub.f32 1.0, %v526
        %v537 = vsub.f32 1.0, %v527
        %v538 = vsub.f32 1.0, %v528
        %v539 = vmul.f32 %v531, %v535
        %v540 = vmul.f32 %v532, %v536
        %v541 = vmul.f32 %v533, %v537
        %v542 = vmul.f32 %v534, %v538
        %v543 = vadd.f32 %v539, %v504
        %v544 = vadd.f32 %v540, %v507
        %v545 = vadd.f32 %v541, %v512
        %v546 = vadd.f32 %v542, %v530
        %547 = vst [vmem:[%s419] sm:$0xff] %v543
        %548 = vst [vmem:[%s419 + $0x8] sm:$0xff] %v544
        %549 = vst [vmem:[%s419 + $0x10] sm:$0xff] %v545
        %550 = vst [vmem:[%s419 + $0x18] sm:$0xff] %v546
        %vm551 = vcmp.gt.f32.partialorder %v543, 0.3
        %vm552 = vcmp.gt.f32.partialorder %v544, 0.3
        %vm553 = vcmp.gt.f32.partialorder %v545, 0.3
        %vm554 = vcmp.gt.f32.partialorder %v546, 0.3
        %v555 = vsel %vm551, 1.0, 0.0
        %v556 = vsel %vm552, 1.0, 0.0
        %v557 = vsel %vm553, 1.0, 0.0
        %v558 = vsel %vm554, 1.0, 0.0
        %v559 = vpack.c.bf16 %v556, %v555
        %v560 = vpack.c.bf16 %v558, %v557
        %v563 = vunpack.c.l.b16 %v559
        %v564 = vunpack.c.h.b16 %v559
        %v565 = vunpack.c.l.b16 %v560
        %v566 = vunpack.c.h.b16 %v560
        %v567 = vpack.c.b16 %v563, %v563
        %v568 = vpack.c.b16 %v564, %v564
        %v569 = vpack.c.b16 %v565, %v565
        %v570 = vpack.c.b16 %v566, %v566
        %575 = vst [vmem:[%s425] sm:$0xf] %v567
        %576 = vst [vmem:[%s425 + $0x4] sm:$0xf] %v568
        %577 = vst [vmem:[%s425 + $0x8] sm:$0xf] %v569
        %578 = vst [vmem:[%s425 + $0xc] sm:$0xf] %v570
        %s579 = sand.u32 %s124, 1
        %s580 = sand.u32 %s124, 1
        %s581 = smul.addr %s580, 32
        %s582 = scalar_lea.vmem [#allocation5], %s581
        %s583 = sand.u32 %s150, 1
        %s584 = sand.u32 %s150, 1
        %s585 = smul.addr %s584, 16
        %s586 = scalar_lea.vmem [#allocation6], %s585
        // Predicated region
        $region157: #{lif_hh_forward.1} parent=143 // pred_check
          %p587 = pneg %p134
        $region158: #{lif_hh_forward.1} parent=143 // pred_check_branch
          %589 = sbr.rel (%p587) target = $region160
        $region159: #{lif_hh_forward.1} parent=143 // pred_region
          %s590 = smul.addr %s17, 8
          %s591 = scalar_lea.vmem %s4, %s590
          // Predicated region
          $region161: #{lif_hh_forward.1} parent=159 // pred_check
            _
          $region162: #{lif_hh_forward.1} parent=159 // pred_check_branch
            %593 = sbr.rel (0) target = $region164
          $region163: #{lif_hh_forward.1} parent=159 // pred_region
            // Predicated region
            $region165: #{lif_hh_forward.1} parent=163 // pred_check
              _
            $region166: #{lif_hh_forward.1} parent=163 // pred_check_branch
              %595 = sbr.rel (0) target = $region168
            $region167: #{lif_hh_forward.1} parent=163 // pred_region
              // Predicated region
              $region180: #{lif_hh_forward.1} parent=167 // pred_check
                _
              $region181: #{lif_hh_forward.1} parent=167 // pred_check_branch
                %616 = sbr.rel (0) target = $region183
              $region182: #{lif_hh_forward.1} parent=167 // pred_region
                loop: start=0, step=1, limit=1
                $region184: #{lif_hh_forward.1} parent=182 // loop_pre_header
                  _
                $region185: #{lif_hh_forward.1} parent=182 // loop_header
                  %s618 = sphi 0, %s622
                  %p619 = scmp.ge.s32.totalorder %s618, 1
                  %s623 = sphi %s582, %s582
                  %s624 = sphi %s591, %s591
                $region186: #{lif_hh_forward.1} parent=182 // loop_header_branch
                  %621 = sbr.rel (%p619) target = $region190
                $region187: #{lif_hh_forward.1} parent=182 // loop_body
                  %v625 = vld [vmem:[%s623] sm:$0xff]
                  %626 = vst [vmem:[%s624] sm:$0xff] %v625
                  %v627 = vld [vmem:[%s623 + $0x8] sm:$0xff]
                  %628 = vst [vmem:[%s624 + $0x20] sm:$0xff] %v627
                  %v629 = vld [vmem:[%s623 + $0x10] sm:$0xff]
                  %630 = vst [vmem:[%s624 + $0x40] sm:$0xff] %v629
                  %v631 = vld [vmem:[%s623 + $0x18] sm:$0xff]
                  %632 = vst [vmem:[%s624 + $0x60] sm:$0xff] %v631
                $region188: #{lif_hh_forward.1} parent=182 // loop_footer
                  %s622 = sadd.s32 1, %s618
                $region189: #{lif_hh_forward.1} parent=182 // loop_footer_branch
                  %617 = sbr.rel target = $region185
                $region190: #{lif_hh_forward.1} parent=182 // loop_exit
                  _
              $region183: #{lif_hh_forward.1} parent=167 // pred_fallthru
                _
              // Predicated region
              $region191: #{lif_hh_forward.1} parent=167 // pred_check
                _
              $region192: #{lif_hh_forward.1} parent=167 // pred_check_branch
                %634 = sbr.rel target = $region194
              $region193: #{lif_hh_forward.1} parent=167 // pred_region
                _
              $region194: #{lif_hh_forward.1} parent=167 // pred_fallthru
                _
            $region168: #{lif_hh_forward.1} parent=163 // pred_fallthru
              _
            // Predicated region
            $region169: #{lif_hh_forward.1} parent=163 // pred_check
              _
            $region170: #{lif_hh_forward.1} parent=163 // pred_check_branch
              %597 = sbr.rel target = $region172
            $region171: #{lif_hh_forward.1} parent=163 // pred_region
              loop: start=0, step=1, limit=1
              $region173: #{lif_hh_forward.1} parent=171 // loop_pre_header
                _
              $region174: #{lif_hh_forward.1} parent=171 // loop_header
                %s600 = sphi 0, %s604
                %p601 = scmp.ge.s32.totalorder %s600, 1
                %s605 = sphi %s582, %s582
                %s606 = sphi %s591, %s591
              $region175: #{lif_hh_forward.1} parent=171 // loop_header_branch
                %603 = sbr.rel (%p601) target = $region179
              $region176: #{lif_hh_forward.1} parent=171 // loop_body
                %v607 = vld [vmem:[%s605] sm:$0xff]
                %608 = vst [vmem:[%s606] sm:$0xff] %v607
                %v609 = vld [vmem:[%s605 + $0x8] sm:$0xff]
                %610 = vst [vmem:[%s606 + $0x20] sm:$0xff] %v609
                %v611 = vld [vmem:[%s605 + $0x10] sm:$0xff]
                %612 = vst [vmem:[%s606 + $0x40] sm:$0xff] %v611
                %v613 = vld [vmem:[%s605 + $0x18] sm:$0xff]
                %614 = vst [vmem:[%s606 + $0x60] sm:$0xff] %v613
              $region177: #{lif_hh_forward.1} parent=171 // loop_footer
                %s604 = sadd.s32 1, %s600
              $region178: #{lif_hh_forward.1} parent=171 // loop_footer_branch
                %599 = sbr.rel target = $region174
              $region179: #{lif_hh_forward.1} parent=171 // loop_exit
                _
            $region172: #{lif_hh_forward.1} parent=163 // pred_fallthru
              _
          $region164: #{lif_hh_forward.1} parent=159 // pred_fallthru
            _
          %635 = vnop
        $region160: #{lif_hh_forward.1} parent=143 // pred_fallthru
          _
        // Predicated region
        $region195: #{lif_hh_forward.1} parent=143 // pred_check
          %p636 = pneg %p160
        $region196: #{lif_hh_forward.1} parent=143 // pred_check_branch
          %638 = sbr.rel (%p636) target = $region198
        $region197: #{lif_hh_forward.1} parent=143 // pred_region
          %s639 = smul.addr %s17, 4
          %s640 = scalar_lea.vmem %s5, %s639
          // Predicated region
          $region199: #{lif_hh_forward.1} parent=197 // pred_check
            _
          $region200: #{lif_hh_forward.1} parent=197 // pred_check_branch
            %642 = sbr.rel (0) target = $region202
          $region201: #{lif_hh_forward.1} parent=197 // pred_region
            // Predicated region
            $region203: #{lif_hh_forward.1} parent=201 // pred_check
              _
            $region204: #{lif_hh_forward.1} parent=201 // pred_check_branch
              %644 = sbr.rel target = $region206
            $region205: #{lif_hh_forward.1} parent=201 // pred_region
              // Predicated region
              $region218: #{lif_hh_forward.1} parent=205 // pred_check
                _
              $region219: #{lif_hh_forward.1} parent=205 // pred_check_branch
                %665 = sbr.rel (0) target = $region221
              $region220: #{lif_hh_forward.1} parent=205 // pred_region
                loop: start=0, step=1, limit=1
                $region222: #{lif_hh_forward.1} parent=220 // loop_pre_header
                  _
                $region223: #{lif_hh_forward.1} parent=220 // loop_header
                  %s667 = sphi 0, %s671
                  %p668 = scmp.ge.s32.totalorder %s667, 1
                  %s672 = sphi %s586, %s586
                  %s673 = sphi %s640, %s640
                $region224: #{lif_hh_forward.1} parent=220 // loop_header_branch
                  %670 = sbr.rel (%p668) target = $region228
                $region225: #{lif_hh_forward.1} parent=220 // loop_body
                  _
                $region226: #{lif_hh_forward.1} parent=220 // loop_footer
                  %s671 = sadd.s32 1, %s667
                $region227: #{lif_hh_forward.1} parent=220 // loop_footer_branch
                  %666 = sbr.rel target = $region223
                $region228: #{lif_hh_forward.1} parent=220 // loop_exit
                  _
                loop: start=0, step=1, limit=1
                $region229: #{lif_hh_forward.1} parent=220 // loop_pre_header
                  _
                $region230: #{lif_hh_forward.1} parent=220 // loop_header
                  %s676 = sphi 0, %s680
                  %p677 = scmp.ge.s32.totalorder %s676, 1
                  %s681 = sphi %s586, %s586
                  %s682 = sphi %s640, %s640
                $region231: #{lif_hh_forward.1} parent=220 // loop_header_branch
                  %679 = sbr.rel (%p677) target = $region235
                $region232: #{lif_hh_forward.1} parent=220 // loop_body
                  %v683 = vld [vmem:[%s681] sm:$0xf]
                  %684 = vst [vmem:[%s682] sm:$0xf] %v683
                  %v685 = vld [vmem:[%s681 + $0x4] sm:$0xf]
                  %686 = vst [vmem:[%s682 + $0x10] sm:$0xf] %v685
                  %v687 = vld [vmem:[%s681 + $0x8] sm:$0xf]
                  %688 = vst [vmem:[%s682 + $0x20] sm:$0xf] %v687
                  %v689 = vld [vmem:[%s681 + $0xc] sm:$0xf]
                  %690 = vst [vmem:[%s682 + $0x30] sm:$0xf] %v689
                $region233: #{lif_hh_forward.1} parent=220 // loop_footer
                  %s680 = sadd.s32 1, %s676
                $region234: #{lif_hh_forward.1} parent=220 // loop_footer_branch
                  %675 = sbr.rel target = $region230
                $region235: #{lif_hh_forward.1} parent=220 // loop_exit
                  _
              $region221: #{lif_hh_forward.1} parent=205 // pred_fallthru
                _
            $region206: #{lif_hh_forward.1} parent=201 // pred_fallthru
              _
            // Predicated region
            $region207: #{lif_hh_forward.1} parent=201 // pred_check
              _
            $region208: #{lif_hh_forward.1} parent=201 // pred_check_branch
              %646 = sbr.rel (0) target = $region210
            $region209: #{lif_hh_forward.1} parent=201 // pred_region
              loop: start=0, step=1, limit=1
              $region211: #{lif_hh_forward.1} parent=209 // loop_pre_header
                _
              $region212: #{lif_hh_forward.1} parent=209 // loop_header
                %s649 = sphi 0, %s653
                %p650 = scmp.ge.s32.totalorder %s649, 1
                %s654 = sphi %s586, %s586
                %s655 = sphi %s640, %s640
              $region213: #{lif_hh_forward.1} parent=209 // loop_header_branch
                %652 = sbr.rel (%p650) target = $region217
              $region214: #{lif_hh_forward.1} parent=209 // loop_body
                %v656 = vld [vmem:[%s654] sm:$0xf]
                %657 = vst [vmem:[%s655] sm:$0xf] %v656
                %v658 = vld [vmem:[%s654 + $0x4] sm:$0xf]
                %659 = vst [vmem:[%s655 + $0x10] sm:$0xf] %v658
                %v660 = vld [vmem:[%s654 + $0x8] sm:$0xf]
                %661 = vst [vmem:[%s655 + $0x20] sm:$0xf] %v660
                %v662 = vld [vmem:[%s654 + $0xc] sm:$0xf]
                %663 = vst [vmem:[%s655 + $0x30] sm:$0xf] %v662
              $region215: #{lif_hh_forward.1} parent=209 // loop_footer
                %s653 = sadd.s32 1, %s649
              $region216: #{lif_hh_forward.1} parent=209 // loop_footer_branch
                %648 = sbr.rel target = $region212
              $region217: #{lif_hh_forward.1} parent=209 // loop_exit
                _
            $region210: #{lif_hh_forward.1} parent=201 // pred_fallthru
              _
          $region202: #{lif_hh_forward.1} parent=197 // pred_fallthru
            _
          %691 = vnop
        $region198: #{lif_hh_forward.1} parent=143 // pred_fallthru
          _
      $region144: #{lif_hh_forward.1} parent=5 // pred_fallthru
        _
      %p692 = scmp.le.s32.totalorder 2, %s12
      // Predicated region
      $region236: #{lif_hh_forward.1} parent=5 // pred_check
        %p693 = pneg %p692
      $region237: #{lif_hh_forward.1} parent=5 // pred_check_branch
        %695 = sbr.rel (%p693) target = $region239
      $region238: #{lif_hh_forward.1} parent=5 // pred_region
        %s696 = ssub.s32 %s12, 2
        // Predicated region
        $region240: #{lif_hh_forward.1} parent=238 // pred_check
          %p697 = pneg %p140
        $region241: #{lif_hh_forward.1} parent=238 // pred_check_branch
          %699 = sbr.rel (%p697) target = $region243
        $region242: #{lif_hh_forward.1} parent=238 // pred_region
          %s700 = sand.u32 %s125, 1
          %s701 = sand.u32 %s125, 1
          %s702 = smul.addr %s701, 32
          %s703 = scalar_lea.vmem [#allocation5], %s702
        $region243: #{lif_hh_forward.1} parent=238 // pred_fallthru
          _
        // Predicated region
        $region244: #{lif_hh_forward.1} parent=238 // pred_check
          %p704 = pneg %p166
        $region245: #{lif_hh_forward.1} parent=238 // pred_check_branch
          %706 = sbr.rel (%p704) target = $region247
        $region246: #{lif_hh_forward.1} parent=238 // pred_region
          %s707 = sand.u32 %s151, 1
          %s708 = sand.u32 %s151, 1
          %s709 = smul.addr %s708, 16
          %s710 = scalar_lea.vmem [#allocation6], %s709
        $region247: #{lif_hh_forward.1} parent=238 // pred_fallthru
          _
      $region239: #{lif_hh_forward.1} parent=5 // pred_fallthru
        _
    $region6: #{lif_hh_forward.1} parent=1 // loop_footer
      %s16 = sadd.s32 1, %s12
    $region7: #{lif_hh_forward.1} parent=1 // loop_footer_branch
      %11 = sbr.rel target = $region3
    $region8: #{lif_hh_forward.1} parent=1 // loop_exit
      _

</llo_original>
